<compile_context>
chip_gen: v6e
topology: v6e:2x2x1
jax: 0.10.0
libtpu: 0.0.40
codegen_flags: <defaults>
</compile_context>

<pallas_src>
import functools
import math

import jax
import jax.numpy as jnp
from jax.experimental import pallas as pl
from jax.experimental.pallas import tpu as pltpu


def _hash_u32(x):
    """lowbias32 integer finalizer (strong avalanche), uint32 -> uint32."""
    x = x ^ (x >> 16)
    x = x * jnp.uint32(0x7FEB352D)
    x = x ^ (x >> 15)
    x = x * jnp.uint32(0x846CA68B)
    x = x ^ (x >> 16)
    return x


def _bits_to_unit_float(bits):
    """uint32 random bits -> float32 uniform in [0, 1) via exponent-bit trick."""
    f = jax.lax.bitcast_convert_type(
        (bits >> 9) | jnp.uint32(0x3F800000), jnp.float32)
    return f - jnp.float32(1.0)


def _gaussian_noise_kernel(seed_ref, x_ref, o_ref, *, mean, std,
                           block_rows, cols, paired):
    i = pl.program_id(0)
    # Scalar seed salt (computed once per tile, SMEM read).
    salt = seed_ref[0] * jnp.int32(-1640531527)  # seed * 0x9E3779B9 (wraps)

    def draw_bits(shape, row_stride):
        row = jax.lax.broadcasted_iota(jnp.int32, shape, 0)
        col = jax.lax.broadcasted_iota(jnp.int32, shape, 1)
        # Globally unique counter per random draw: tile offset + local index,
        # salted by the seed (wraparound int32 arithmetic is intended).
        ctr = (i * block_rows + row) * row_stride + col + salt
        c = jax.lax.bitcast_convert_type(ctr, jnp.uint32)
        b1 = _hash_u32(c)
        b2 = _hash_u32(b1 ^ jnp.uint32(0x9E3779B9))
        return b1, b2

    def box_muller(b1, b2):
        u1 = jnp.float32(1.0) - _bits_to_unit_float(b1)   # (0, 1] -> log finite
        u2 = _bits_to_unit_float(b2)                       # [0, 1)
        r = jnp.sqrt(jnp.float32(-2.0) * jnp.log(u1))
        theta = jnp.float32(2.0 * math.pi) * u2
        return r * jnp.cos(theta), r * jnp.sin(theta)

    m = jnp.float32(mean)
    s = jnp.float32(std)

    if paired:
        # Use both Box-Muller outputs: cos half on the left cols, sin half on
        # the right cols (lane-aligned split).  Halves PRNG words and
        # transcendentals per element.
        half = cols // 2
        b1, b2 = draw_bits((block_rows, half), half)
        z0, z1 = box_muller(b1, b2)
        xl = x_ref[:, :half].astype(jnp.float32)
        xr = x_ref[:, half:].astype(jnp.float32)
        o_ref[:, :half] = (xl + m + s * z0).astype(o_ref.dtype)
        o_ref[:, half:] = (xr + m + s * z1).astype(o_ref.dtype)
    else:
        b1, b2 = draw_bits((block_rows, cols), cols)
        z0, _ = box_muller(b1, b2)
        o_ref[...] = (x_ref[...].astype(jnp.float32) + m + s * z0).astype(
            o_ref.dtype)


def _choose_block_rows(rows, cols, itemsize, target_bytes=4 * 1024 * 1024):
    """Largest row-tile (multiple of 8) with footprint <= target_bytes."""
    if rows * cols * itemsize <= target_bytes or rows <= 8:
        return rows
    max_rows = min(rows, max(8, target_bytes // (cols * itemsize)))
    r = max(8, (max_rows // 8) * 8)
    # Prefer a clean divisor (no partial last tile); otherwise accept a
    # partial block (Pallas masks the out-of-bounds writes).
    d = r
    while d >= 8:
        if rows % d == 0:
            return d
        d -= 8
    return r


def gaussian_noise(x, seed, *, mean=0.0, std=0.1):
    """x: (N, C, H, W).  seed: int32 array of shape (1,)."""
    n, c, h, w = x.shape
    rows, cols = n * c, h * w
    x2d = x.reshape(rows, cols)

    block_rows = _choose_block_rows(rows, cols, x.dtype.itemsize)
    grid = (pl.cdiv(rows, block_rows),)
    # Paired Box-Muller only when the column split stays lane-aligned.
    paired = (cols % 256 == 0)

    kernel = functools.partial(
        _gaussian_noise_kernel, mean=mean, std=std,
        block_rows=block_rows, cols=cols, paired=paired)

    total = rows * cols
    cost = pl.CostEstimate(
        flops=16 * total,
        transcendentals=2 * total,
        bytes_accessed=2 * total * x.dtype.itemsize,
    )

    out2d = pl.pallas_call(
        kernel,
        out_shape=jax.ShapeDtypeStruct((rows, cols), x.dtype),
        grid_spec=pltpu.PrefetchScalarGridSpec(
            num_scalar_prefetch=1,             # seed lands in SMEM
            grid=grid,
            in_specs=[
                pl.BlockSpec((block_rows, cols), lambda i, seed: (i, 0)),
            ],
            out_specs=pl.BlockSpec((block_rows, cols), lambda i, seed: (i, 0)),
        ),
        compiler_params=pltpu.CompilerParams(
            dimension_semantics=("parallel",),
            vmem_limit_bytes=32 * 1024 * 1024,
        ),
        cost_estimate=cost,
    )(seed, x2d)

    return out2d.reshape(n, c, h, w)


if __name__ == "__main__":
    key = jax.random.PRNGKey(0)
    x = jax.random.normal(key, (2, 4, 16, 16), dtype=jnp.float32)
    seed = jnp.array([0], dtype=jnp.int32)

    y = gaussian_noise(x, seed, mean=0.0, std=0.1)
    y = jax.block_until_ready(y)

    # sanity: output shape/dtype match input; noise ~ N(0, 0.1)
    assert y.shape == x.shape and y.dtype == x.dtype
    noise = y - x
    assert float(jnp.abs(jnp.mean(noise))) < 0.05
    assert 0.05 < float(jnp.std(noise)) < 0.2

    print("KERNEL_OK")
</pallas_src>

<mosaic_0001>
module attributes {stable_mosaic.version = 11 : i64} {
  func.func @_gaussian_noise_kernel(%arg0: i32, %arg1: memref<1xi32, #tpu.memory_space<smem>>, %arg2: memref<8x256xf32, #tpu.memory_space<vmem>>, %arg3: memref<8x256xf32, #tpu.memory_space<vmem>>) attributes {dimension_semantics = [#tpu.dimension_semantics<parallel>], iteration_bounds = array<i64: 1>, scalar_prefetch = 1 : i64, scratch_operands = 0 : i64, tpu.core_type = #tpu.core_type<tc>, window_params = [{transform_indices = @transform_0, window_bounds = array<i64: 8, 256>}, {transform_indices = @transform_1, window_bounds = array<i64: 8, 256>}]} {
    %c0 = arith.constant 0 : index
    %0 = memref.load %arg1[%c0] : memref<1xi32, #tpu.memory_space<smem>>
    %c-1640531527_i32 = arith.constant -1640531527 : i32
    %1 = arith.muli %0, %c-1640531527_i32 : i32
    %2 = tpu.iota {dimensions = array<i32: 0>} : vector<8x128xi32>
    %3 = tpu.iota {dimensions = array<i32: 1>} : vector<8x128xi32>
    %c8_i32 = arith.constant 8 : i32
    %4 = arith.muli %arg0, %c8_i32 : i32
    %5 = vector.broadcast %4 : i32 to vector<8x128xi32>
    %6 = arith.addi %5, %2 : vector<8x128xi32>
    %c128_i32 = arith.constant 128 : i32
    %7 = vector.broadcast %c128_i32 : i32 to vector<8x128xi32>
    %8 = arith.muli %6, %7 : vector<8x128xi32>
    %9 = arith.addi %8, %3 : vector<8x128xi32>
    %10 = vector.broadcast %1 : i32 to vector<8x128xi32>
    %11 = arith.addi %9, %10 : vector<8x128xi32>
    %12 = tpu.bitcast %11 : vector<8x128xi32> -> vector<8x128xi32>
    %c16_i32 = arith.constant 16 : i32
    %13 = vector.broadcast %c16_i32 : i32 to vector<8x128xi32>
    %14 = arith.shrui %12, %13 : vector<8x128xi32>
    %15 = arith.xori %12, %14 : vector<8x128xi32>
    %c2146121005_i32 = arith.constant 2146121005 : i32
    %16 = vector.broadcast %c2146121005_i32 : i32 to vector<8x128xi32>
    %17 = arith.muli %15, %16 : vector<8x128xi32>
    %c15_i32 = arith.constant 15 : i32
    %18 = vector.broadcast %c15_i32 : i32 to vector<8x128xi32>
    %19 = arith.shrui %17, %18 : vector<8x128xi32>
    %20 = arith.xori %17, %19 : vector<8x128xi32>
    %c-2073254261_i32 = arith.constant -2073254261 : i32
    %21 = vector.broadcast %c-2073254261_i32 : i32 to vector<8x128xi32>
    %22 = arith.muli %20, %21 : vector<8x128xi32>
    %c16_i32_0 = arith.constant 16 : i32
    %23 = vector.broadcast %c16_i32_0 : i32 to vector<8x128xi32>
    %24 = arith.shrui %22, %23 : vector<8x128xi32>
    %25 = arith.xori %22, %24 : vector<8x128xi32>
    %c-1640531527_i32_1 = arith.constant -1640531527 : i32
    %26 = vector.broadcast %c-1640531527_i32_1 : i32 to vector<8x128xi32>
    %27 = arith.xori %25, %26 : vector<8x128xi32>
    %c16_i32_2 = arith.constant 16 : i32
    %28 = vector.broadcast %c16_i32_2 : i32 to vector<8x128xi32>
    %29 = arith.shrui %27, %28 : vector<8x128xi32>
    %30 = arith.xori %27, %29 : vector<8x128xi32>
    %c2146121005_i32_3 = arith.constant 2146121005 : i32
    %31 = vector.broadcast %c2146121005_i32_3 : i32 to vector<8x128xi32>
    %32 = arith.muli %30, %31 : vector<8x128xi32>
    %c15_i32_4 = arith.constant 15 : i32
    %33 = vector.broadcast %c15_i32_4 : i32 to vector<8x128xi32>
    %34 = arith.shrui %32, %33 : vector<8x128xi32>
    %35 = arith.xori %32, %34 : vector<8x128xi32>
    %c-2073254261_i32_5 = arith.constant -2073254261 : i32
    %36 = vector.broadcast %c-2073254261_i32_5 : i32 to vector<8x128xi32>
    %37 = arith.muli %35, %36 : vector<8x128xi32>
    %c16_i32_6 = arith.constant 16 : i32
    %38 = vector.broadcast %c16_i32_6 : i32 to vector<8x128xi32>
    %39 = arith.shrui %37, %38 : vector<8x128xi32>
    %40 = arith.xori %37, %39 : vector<8x128xi32>
    %c9_i32 = arith.constant 9 : i32
    %41 = vector.broadcast %c9_i32 : i32 to vector<8x128xi32>
    %42 = arith.shrui %25, %41 : vector<8x128xi32>
    %c1065353216_i32 = arith.constant 1065353216 : i32
    %43 = vector.broadcast %c1065353216_i32 : i32 to vector<8x128xi32>
    %44 = arith.ori %42, %43 : vector<8x128xi32>
    %45 = tpu.bitcast %44 : vector<8x128xi32> -> vector<8x128xf32>
    %cst = arith.constant 1.000000e+00 : f32
    %46 = vector.broadcast %cst : f32 to vector<8x128xf32>
    %47 = arith.subf %45, %46 : vector<8x128xf32>
    %cst_7 = arith.constant 1.000000e+00 : f32
    %48 = vector.broadcast %cst_7 : f32 to vector<8x128xf32>
    %49 = arith.subf %48, %47 : vector<8x128xf32>
    %c9_i32_8 = arith.constant 9 : i32
    %50 = vector.broadcast %c9_i32_8 : i32 to vector<8x128xi32>
    %51 = arith.shrui %40, %50 : vector<8x128xi32>
    %c1065353216_i32_9 = arith.constant 1065353216 : i32
    %52 = vector.broadcast %c1065353216_i32_9 : i32 to vector<8x128xi32>
    %53 = arith.ori %51, %52 : vector<8x128xi32>
    %54 = tpu.bitcast %53 : vector<8x128xi32> -> vector<8x128xf32>
    %cst_10 = arith.constant 1.000000e+00 : f32
    %55 = vector.broadcast %cst_10 : f32 to vector<8x128xf32>
    %56 = arith.subf %54, %55 : vector<8x128xf32>
    %57 = math.log %49 : vector<8x128xf32>
    %cst_11 = arith.constant -2.000000e+00 : f32
    %58 = vector.broadcast %cst_11 : f32 to vector<8x128xf32>
    %59 = arith.mulf %58, %57 : vector<8x128xf32>
    %60 = math.sqrt %59 : vector<8x128xf32>
    %cst_12 = arith.constant 6.28318548 : f32
    %61 = vector.broadcast %cst_12 : f32 to vector<8x128xf32>
    %62 = arith.mulf %61, %56 : vector<8x128xf32>
    %63 = math.cos %62 : vector<8x128xf32>
    %64 = arith.mulf %60, %63 : vector<8x128xf32>
    %65 = math.sin %62 : vector<8x128xf32>
    %66 = arith.mulf %60, %65 : vector<8x128xf32>
    %c0_13 = arith.constant 0 : index
    %c0_14 = arith.constant 0 : index
    %67 = vector.load %arg2[%c0_13, %c0_14] : memref<8x256xf32, #tpu.memory_space<vmem>>, vector<8x128xf32>
    %c0_15 = arith.constant 0 : index
    %c128 = arith.constant 128 : index
    %68 = vector.load %arg2[%c0_15, %c128] : memref<8x256xf32, #tpu.memory_space<vmem>>, vector<8x128xf32>
    %cst_16 = arith.constant 0.000000e+00 : f32
    %69 = vector.broadcast %cst_16 : f32 to vector<8x128xf32>
    %70 = arith.addf %67, %69 : vector<8x128xf32>
    %cst_17 = arith.constant 1.000000e-01 : f32
    %71 = vector.broadcast %cst_17 : f32 to vector<8x128xf32>
    %72 = arith.mulf %71, %64 : vector<8x128xf32>
    %73 = arith.addf %70, %72 : vector<8x128xf32>
    %c0_18 = arith.constant 0 : index
    %c0_19 = arith.constant 0 : index
    %74 = vector.load %arg3[%c0_18, %c0_19] : memref<8x256xf32, #tpu.memory_space<vmem>>, vector<8x128xf32>
    tpu.vector_store %arg3[%c0_18, %c0_19], %73 {strides = array<i32>} : memref<8x256xf32, #tpu.memory_space<vmem>>, vector<8x128xf32>,
    %cst_20 = arith.constant 0.000000e+00 : f32
    %75 = vector.broadcast %cst_20 : f32 to vector<8x128xf32>
    %76 = arith.addf %68, %75 : vector<8x128xf32>
    %cst_21 = arith.constant 1.000000e-01 : f32
    %77 = vector.broadcast %cst_21 : f32 to vector<8x128xf32>
    %78 = arith.mulf %77, %66 : vector<8x128xf32>
    %79 = arith.addf %76, %78 : vector<8x128xf32>
    %c0_22 = arith.constant 0 : index
    %c128_23 = arith.constant 128 : index
    %80 = vector.load %arg3[%c0_22, %c128_23] : memref<8x256xf32, #tpu.memory_space<vmem>>, vector<8x128xf32>
    tpu.vector_store %arg3[%c0_22, %c128_23], %79 {strides = array<i32>} : memref<8x256xf32, #tpu.memory_space<vmem>>, vector<8x128xf32>,
    return
  }
  func.func @transform_0(%arg0: i32, %arg1: memref<1xi32, #tpu.memory_space<smem>>) -> (i32, i32) {
    %c0_i32 = arith.constant 0 : i32
    %c0_i32_0 = arith.constant 0 : i32
    return %arg0, %c0_i32 : i32, i32
  }
  func.func @transform_1(%arg0: i32, %arg1: memref<1xi32, #tpu.memory_space<smem>>) -> (i32, i32) {
    %c0_i32 = arith.constant 0 : i32
    %c0_i32_0 = arith.constant 0 : i32
    return %arg0, %c0_i32 : i32, i32
  }
}

</mosaic_0001>

<llo_original>
// kernel: tpu_custom_call.1
$region0: #{tpu_custom_call.1}
  #allocation0 [shape = 'u32[]', space=smem, size = 0x4, offset = 0x4, fixed_abs, tag = 'smem constant byte address 0x4 - core index']
  #allocation1 [shape = 'u32[144,128]{1,0:T(1,128)}', space=vmem, size = 0x12000, scoped, tag = 'internal scratch']
  #allocation2 [shape = 's32[1]{0}', space=sflag, size = 0x4, scoped, tag = 'scoped memory for tpu_custom_call.1']
  #allocation3 [shape = 's32[1]{0:T(128)S(6)}', space=smem, size = 0x200, scoped, tag = 'prefetched SMEM operand 0']
  %s0 = inlined_call_operand.<no memory space> [shape: s32[1], index: 0, kind: input, shape index: {}]
  %s1 = inlined_call_operand.hbm [shape: f32[8,256], index: 1, kind: input, shape index: {}]
  %s2 = inlined_call_operand.hbm [shape: f32[8,256], index: 2, kind: output, shape index: {}]
  %s3 = sld [smem:[#allocation0]]
  $region18: #{tpu_custom_call.1} parent=0
    _
  %s5 = ssub.s32 1, %s3
  %s6 = scalar_select 0, %s5, %s3
  %7 = sst [smem:[#allocation3]] %s0
  $region1: #{tpu_custom_call.1} parent=0
    #allocation4 [shape = 'u8[8192]{0}', space=vmem, size = 0x2000, scoped, tag = 'input window, operand 1, single buffered']
    #allocation5 [shape = 's32[1]{0}', space=sflag, size = 0x4, scoped, tag = 'scoped memory for tpu_custom_call.1']
    #allocation6 [shape = 's32[1]{0}', space=sflag, size = 0x4, scoped, tag = 'scoped memory for tpu_custom_call.1']
    #allocation7 [shape = 'u8[8192]{0}', space=vmem, size = 0x2000, scoped, tag = 'output window, operand 0, single buffered']
    %8 = vsyncpa [#allocation5], 0
    %9 = vsyncpa [#allocation6], 0
    // Predicated region
    $region2: #{tpu_custom_call.1} parent=1 // pred_check
      _
    $region3: #{tpu_custom_call.1} parent=1 // pred_check_branch
      %11 = sbr.rel (0) target = $region5
    $region4: #{tpu_custom_call.1} parent=1 // pred_region
      %s13 = ssub.s32 256, 256
      %14 = vsyncadd [#allocation5], %s13
      %s16 = sshll.u32 [#allocation4], 4
      %s17 = int_to_ptr.vmem [resolvable:$true] %s16
      %19 = dma.hbm_to_vmem [thread:$0]  %s1, 256, %s17, [#allocation5]
    $region5: #{tpu_custom_call.1} parent=1 // pred_fallthru
      _
    // Predicated region
    $region6: #{tpu_custom_call.1} parent=1 // pred_check
      _
    $region7: #{tpu_custom_call.1} parent=1 // pred_check_branch
      %21 = sbr.rel (0) target = $region9
    $region8: #{tpu_custom_call.1} parent=1 // pred_region
      %22 = dma.done [#allocation5], 256
    $region9: #{tpu_custom_call.1} parent=1 // pred_fallthru
      _
    %s23 = sld [smem:[#allocation3]]
    %s24 = smul.u32 %s23, 2654435769
    %v25 = vlaneseq
    %v26 = vshrl.u32 %v25, 7
    %v27 = vlaneseq
    %v28 = vand.u32 %v27, 127
    %s29 = smul.u32 0, 8
    %v30 = vstv %s29
    %v31 = vadd.s32 %v30, %v26
    %v32 = vmul.u32 %v31, 128
    %v33 = vadd.s32 %v32, %v28
    %v34 = vstv %s24
    %v35 = vadd.s32 %v33, %v34
    %v36 = vshrl.u32 %v35, 16
    %v37 = vxor.u32 %v35, %v36
    %v38 = vmul.u32 %v37, 2146121005
    %v39 = vshrl.u32 %v38, 15
    %v40 = vxor.u32 %v38, %v39
    %v41 = vmul.u32 %v40, 2221713035
    %v42 = vshrl.u32 %v41, 16
    %v43 = vxor.u32 %v41, %v42
    %v44 = vxor.u32 %v43, 2654435769
    %v45 = vshrl.u32 %v44, 16
    %v46 = vxor.u32 %v44, %v45
    %v47 = vmul.u32 %v46, 2146121005
    %v48 = vshrl.u32 %v47, 15
    %v49 = vxor.u32 %v47, %v48
    %v50 = vmul.u32 %v49, 2221713035
    %v51 = vshrl.u32 %v50, 16
    %v52 = vxor.u32 %v50, %v51
    %v53 = vshrl.u32 %v43, 9
    %v54 = vor.u32 %v53, 1065353216
    %v56 = vsub.f32 %v54, 1.0
    %v57 = vsub.f32 1.0, %v56
    %v58 = vshrl.u32 %v52, 9
    %v59 = vor.u32 %v58, 1065353216
    %v61 = vsub.f32 %v59, 1.0
    %v62 = vlog2.pop %v57
    %v63 = vmul.f32 %v62, 0.6931472
    %v64 = vmul.f32 %v63, -2.0
    %v65 = vrsqrt.pop %v64
    %v66 = vmul.f32 %v64, %v65
    %vm67 = vcmp.eq.f32.partialorder %v64, inf
    %v68 = vsel %vm67, %v64, %v66
    %vm69 = vcmp.eq.f32.partialorder %v64, 0.0
    %v70 = vand.u32 %v64, 2147483648
    %v71 = vsel %vm69, %v70, %v68
    %v72 = vmul.f32 %v61, 6.2831855
    %v73 = vand.u32 2147483647, %v72
    %vm74 = vcmp.le.f32.partialorder %v73, 0.7853982
    %vm75 = vcmp.lt.s32.totalorder %v72, 0
    %v76 = vand.u32 %v72, 2139095040
    %v77 = vshrl.u32 %v76, 23
    %v78 = vsub.s32 %v77, 127
    %v79 = vand.u32 2147483647, %v72
    %v80 = vand.u32 %v79, 8388607
    %v81 = vor.u32 %v80, 8388608
    %v82 = vsub.s32 0, %v81
    %v83 = vadd.s32 %v78, 1
    %vm84 = vcmp.gt.s32.totalorder %v83, 0
    %v85 = vsel %vm84, %v83, 0
    %v86 = vshrl.u32 %v85, 5
    %v87 = vand.u32 %v85, 31
    %v88 = vsub.s32 32, %v87
    %v89 = vshrl.u32 683565275, %v88
    %v90 = vshll.u32 683565275, %v87
    %v91 = vshrl.u32 2475754826, %v88
    %v92 = vor.u32 %v90, %v91
    %v93 = vshll.u32 2475754826, %v87
    %v94 = vshrl.u32 2131351028, %v88
    %v95 = vor.u32 %v93, %v94
    %v96 = vshll.u32 2131351028, %v87
    %v97 = vshrl.u32 2102212464, %v88
    %v98 = vor.u32 %v96, %v97
    %v99 = vshll.u32 2102212464, %v87
    %v100 = vshrl.u32 920167782, %v88
    %v101 = vor.u32 %v99, %v100
    %v102 = vshll.u32 920167782, %v87
    %v103 = vshrl.u32 1326507024, %v88
    %v104 = vor.u32 %v102, %v103
    %vm105 = vcmp.lt.s32.totalorder %v86, 1
    %vm106 = vcmp.lt.s32.totalorder %v86, 2
    %vm107 = vcmp.lt.s32.totalorder %v86, 3
    %vm108 = vcmp.lt.s32.totalorder %v86, 4
    %v109 = vsel %vm105, %v89, %v92
    %v110 = vsel %vm108, %v98, 2102212464
    %v111 = vsel %vm107, %v95, %v110
    %v112 = vsel %vm106, %v109, %v111
    %v113 = vsel %vm105, %v92, %v95
    %v114 = vsel %vm108, %v101, 920167782
    %v115 = vsel %vm107, %v98, %v114
    %v116 = vsel %vm106, %v113, %v115
    %v117 = vsel %vm105, %v95, %v98
    %v118 = vsel %vm108, %v104, 1326507024
    %v119 = vsel %vm107, %v101, %v118
    %v120 = vsel %vm106, %v117, %v119
    %v121 = vshll.u32 %v81, 8
    %v122 = vmul.u32.u64.compose %v121, %v120
    %v123 = vextract.low.u32 %v122
    %v124 = vextract.high.u32 %v122
    %v125 = vmul.u32.u64.compose %v121, %v116
    %v126 = vextract.low.u32 %v125
    %v127 = vextract.high.u32 %v125
    %v128 = vmul.u32 %v121, %v112
    %v129 = vadd.s32 %v124, %v126
    %vm130 = vc.u32 %v124, %v126
    %v131 = vadd.s32 %v127, 1
    %v132 = vsel %vm130, %v131, %v127
    %v133 = vadd.s32 %v128, %v132
    %v134 = vadd.s32 %v133, 536870912
    %v135 = vshrl.u32 %v134, 30
    %v136 = vshll.u32 %v135, 30
    %v137 = vsub.s32 %v133, %v136
    %vm138 = vcmp.lt.s32.totalorder %v137, 0
    %v139 = vsub.s32 0, %v137
    %v140 = vsel %vm138, %v139, %v137
    %v141 = vclz %v140
    %v142 = vsub.s32 %v141, 2
    %vm143 = vcmp.gt.s32.totalorder 0, %v142
    %v144 = vsel %vm143, 0, %v142
    %v145 = vsub.s32 32, %v144
    %v146 = vshll.u32 %v137, %v144
    %v147 = vshrl.u32 %v129, %v145
    %v148 = vor.u32 %v146, %v147
    %v149 = vsub.s32 4294967266, %v144
    %v150 = vadd.s32 %v149, 127
    %v151 = vshll.u32 %v150, 23
    %v152 = vor.u32 4788187, %v151
    %v153 = vand.u32 2147483647, %v152
    %v155 = vcvt.s32.f32 %v148
    %v156 = vmul.f32 %v155, %v153
    %v157 = vxor.u32 %v156, 2147483648
    %v158 = vsel %vm75, %v157, %v156
    %v159 = vsub.s32 4, %v135
    %v160 = vsel %vm75, %v159, %v135
    %v161 = vsel %vm74, %v72, %v158
    %v162 = vsel %vm74, 0, %v160
    %v163 = vcosq.f32.pop %v161
    %v164 = vsinq.f32.pop %v161
    %vm165 = vweird.f32 %v72
    %v166 = vand.u32 %v162, 3
    %vm167 = vcmp.lt.s32.totalorder %v166, 2
    %vm168 = vcmp.eq.s32.totalorder %v166, 0
    %v169 = vxor.u32 %v164, 2147483648
    %v170 = vsel %vm168, %v163, %v169
    %vm171 = vcmp.eq.s32.totalorder %v166, 2
    %v172 = vxor.u32 %v163, 2147483648
    %v173 = vsel %vm171, %v172, %v164
    %v174 = vsel %vm167, %v170, %v173
    %v175 = vsel %vm165, nan, %v174
    %v176 = vmul.f32 %v71, %v175
    %v177 = vand.u32 2147483647, %v72
    %vm178 = vcmp.le.f32.partialorder %v177, 0.7853982
    %vm179 = vcmp.lt.s32.totalorder %v72, 0
    %v180 = vand.u32 %v72, 2139095040
    %v181 = vshrl.u32 %v180, 23
    %v182 = vsub.s32 %v181, 127
    %v183 = vand.u32 2147483647, %v72
    %v184 = vand.u32 %v183, 8388607
    %v185 = vor.u32 %v184, 8388608
    %v186 = vsub.s32 0, %v185
    %v187 = vadd.s32 %v182, 1
    %vm188 = vcmp.gt.s32.totalorder %v187, 0
    %v189 = vsel %vm188, %v187, 0
    %v190 = vshrl.u32 %v189, 5
    %v191 = vand.u32 %v189, 31
    %v192 = vsub.s32 32, %v191
    %v193 = vshrl.u32 683565275, %v192
    %v194 = vshll.u32 683565275, %v191
    %v195 = vshrl.u32 2475754826, %v192
    %v196 = vor.u32 %v194, %v195
    %v197 = vshll.u32 2475754826, %v191
    %v198 = vshrl.u32 2131351028, %v192
    %v199 = vor.u32 %v197, %v198
    %v200 = vshll.u32 2131351028, %v191
    %v201 = vshrl.u32 2102212464, %v192
    %v202 = vor.u32 %v200, %v201
    %v203 = vshll.u32 2102212464, %v191
    %v204 = vshrl.u32 920167782, %v192
    %v205 = vor.u32 %v203, %v204
    %v206 = vshll.u32 920167782, %v191
    %v207 = vshrl.u32 1326507024, %v192
    %v208 = vor.u32 %v206, %v207
    %vm209 = vcmp.lt.s32.totalorder %v190, 1
    %vm210 = vcmp.lt.s32.totalorder %v190, 2
    %vm211 = vcmp.lt.s32.totalorder %v190, 3
    %vm212 = vcmp.lt.s32.totalorder %v190, 4
    %v213 = vsel %vm209, %v193, %v196
    %v214 = vsel %vm212, %v202, 2102212464
    %v215 = vsel %vm211, %v199, %v214
    %v216 = vsel %vm210, %v213, %v215
    %v217 = vsel %vm209, %v196, %v199
    %v218 = vsel %vm212, %v205, 920167782
    %v219 = vsel %vm211, %v202, %v218
    %v220 = vsel %vm210, %v217, %v219
    %v221 = vsel %vm209, %v199, %v202
    %v222 = vsel %vm212, %v208, 1326507024
    %v223 = vsel %vm211, %v205, %v222
    %v224 = vsel %vm210, %v221, %v223
    %v225 = vshll.u32 %v185, 8
    %v226 = vmul.u32.u64.compose %v225, %v224
    %v227 = vextract.low.u32 %v226
    %v228 = vextract.high.u32 %v226
    %v229 = vmul.u32.u64.compose %v225, %v220
    %v230 = vextract.low.u32 %v229
    %v231 = vextract.high.u32 %v229
    %v232 = vmul.u32 %v225, %v216
    %v233 = vadd.s32 %v228, %v230
    %vm234 = vc.u32 %v228, %v230
    %v235 = vadd.s32 %v231, 1
    %v236 = vsel %vm234, %v235, %v231
    %v237 = vadd.s32 %v232, %v236
    %v238 = vadd.s32 %v237, 536870912
    %v239 = vshrl.u32 %v238, 30
    %v240 = vshll.u32 %v239, 30
    %v241 = vsub.s32 %v237, %v240
    %vm242 = vcmp.lt.s32.totalorder %v241, 0
    %v243 = vsub.s32 0, %v241
    %v244 = vsel %vm242, %v243, %v241
    %v245 = vclz %v244
    %v246 = vsub.s32 %v245, 2
    %vm247 = vcmp.gt.s32.totalorder 0, %v246
    %v248 = vsel %vm247, 0, %v246
    %v249 = vsub.s32 32, %v248
    %v250 = vshll.u32 %v241, %v248
    %v251 = vshrl.u32 %v233, %v249
    %v252 = vor.u32 %v250, %v251
    %v253 = vsub.s32 4294967266, %v248
    %v254 = vadd.s32 %v253, 127
    %v255 = vshll.u32 %v254, 23
    %v256 = vor.u32 4788187, %v255
    %v257 = vand.u32 2147483647, %v256
    %v259 = vcvt.s32.f32 %v252
    %v260 = vmul.f32 %v259, %v257
    %v261 = vxor.u32 %v260, 2147483648
    %v262 = vsel %vm179, %v261, %v260
    %v263 = vsub.s32 4, %v239
    %v264 = vsel %vm179, %v263, %v239
    %v265 = vsel %vm178, %v72, %v262
    %v266 = vsel %vm178, 0, %v264
    %v267 = vcosq.f32.pop %v265
    %v268 = vsinq.f32.pop %v265
    %vm269 = vweird.f32 %v72
    %v270 = vadd.s32 %v266, 3
    %v271 = vand.u32 %v270, 3
    %vm272 = vcmp.lt.s32.totalorder %v271, 2
    %vm273 = vcmp.eq.s32.totalorder %v271, 0
    %v274 = vxor.u32 %v268, 2147483648
    %v275 = vsel %vm273, %v267, %v274
    %vm276 = vcmp.eq.s32.totalorder %v271, 2
    %v277 = vxor.u32 %v267, 2147483648
    %v278 = vsel %vm276, %v277, %v268
    %v279 = vsel %vm272, %v275, %v278
    %v280 = vsel %vm269, nan, %v279
    %v281 = vmul.f32 %v71, %v280
    %v282 = vld [vmem:[#allocation4] sm:$0xff]
    %v283 = vld [vmem:[#allocation4 + $0x8] sm:$0xff]
    %v284 = vadd.f32 %v282, 0.0
    %v285 = vmul.f32 %v176, 0.1
    %v286 = vadd.f32 %v284, %v285
    %287 = vst [vmem:[#allocation7] sm:$0xff] %v286
    %v288 = vadd.f32 %v283, 0.0
    %v289 = vmul.f32 %v281, 0.1
    %v290 = vadd.f32 %v288, %v289
    %291 = vst [vmem:[#allocation7 + $0x8] sm:$0xff] %v290
    // Predicated region
    $region10: #{tpu_custom_call.1} parent=1 // pred_check
      _
    $region11: #{tpu_custom_call.1} parent=1 // pred_check_branch
      %293 = sbr.rel (0) target = $region13
    $region12: #{tpu_custom_call.1} parent=1 // pred_region
      %s295 = ssub.s32 256, 256
      %296 = vsyncadd [#allocation6], %s295
      %s298 = sshll.u32 [#allocation7], 4
      %s299 = int_to_ptr.vmem [resolvable:$true] %s298
      %301 = dma.vmem_to_hbm [thread:$0]  %s299, 256, %s2, [#allocation6]
    $region13: #{tpu_custom_call.1} parent=1 // pred_fallthru
      _
    // Predicated region
    $region14: #{tpu_custom_call.1} parent=1 // pred_check
      _
    $region15: #{tpu_custom_call.1} parent=1 // pred_check_branch
      %303 = sbr.rel (0) target = $region17
    $region16: #{tpu_custom_call.1} parent=1 // pred_region
      %304 = dma.done [#allocation6], 256
    $region17: #{tpu_custom_call.1} parent=1 // pred_fallthru
      _
    %305 = vsyncpa [#allocation5], 1
    %306 = vsyncpa [#allocation6], 1

</llo_original>
